<compile_context>
chip_gen: v7x
topology: tpu7x:2x2x1
jax: 0.10.0
libtpu: 0.0.40
codegen_flags: <defaults>
</compile_context>

<pallas_src>
import jax
import jax.numpy as jnp
from jax import lax
from jax.experimental import pallas as pl
from jax.experimental.pallas import tpu as pltpu


def _make_cell_kernel(C, H, W, L):
    """L = lanes per grid block = batch_per_block * H * W."""

    def kernel(grid_ref, rand_ref, mru_ref, mrd_ref, mcl_ref, mcr_ref,
               w1_ref, b1_ref, w2_ref, b2_ref, out_ref):
        g = grid_ref[0]                       # (C, L) f32
        m_up = mru_ref[...]                   # (1, L): 1.0 where row-1 exists
        m_dn = mrd_ref[...]                   # (1, L): 1.0 where row+1 exists
        m_lt = mcl_ref[...]                   # (1, L): 1.0 where col-1 exists
        m_rt = mcr_ref[...]                   # (1, L): 1.0 where col+1 exists

        def sh(x, s):
            # y[..., p] = x[..., p + s] (circular lane rotation; caller
            # multiplies by a validity mask so out-of-bounds / cross-batch
            # positions become exact zeros -> conv zero-padding semantics).
            k = (-s) % L
            return x if k == 0 else pltpu.roll(x, shift=k, axis=1)

        # ---- Perception: separable Sobel filters (zero padding) -------------
        g_up = sh(g, -W) * m_up               # value from spatial row above
        g_dn = sh(g, +W) * m_dn               # value from spatial row below
        a = g_up + 2.0 * g + g_dn             # vertical [1, 2, 1] smoothing
        d = g_dn - g_up                       # vertical [-1, 0, 1] derivative
        sob_x = sh(a, +1) * m_rt - sh(a, -1) * m_lt
        sob_y = sh(d, -1) * m_lt + 2.0 * d + sh(d, +1) * m_rt

        # ---- StateNetwork: fused 1x1 conv -> ReLU -> 1x1 conv (MXU) ---------
        perc = jnp.concatenate([sob_x, sob_y, g], axis=0)        # (3C, L)
        hid = (jnp.dot(w1_ref[...], perc,
                       preferred_element_type=jnp.float32) + b1_ref[...])
        hid = jnp.maximum(hid, 0.0)                              # (hidden, L)
        delta = (jnp.dot(w2_ref[...], hid,
                         preferred_element_type=jnp.float32) + b2_ref[...])

        # ---- stochastic_grid_update -----------------------------------------
        smask = (rand_ref[...] < 0.5).astype(jnp.float32)        # (1, L)
        x = g + delta * smask                                    # (C, L)

        # ---- alive_cells_mask: separable 3x3 max-pool on channel 3 ----------
        # Zero fill is equivalent to -inf fill here because `pooled` only
        # feeds the `> 0.1` threshold and 0 < 0.1.
        alpha = x[3:4, :]                                        # (1, L)
        vmax = jnp.maximum(jnp.maximum(sh(alpha, -W) * m_up,
                                       sh(alpha, +W) * m_dn), alpha)
        pooled = jnp.maximum(jnp.maximum(sh(vmax, -1) * m_lt,
                                         sh(vmax, +1) * m_rt), vmax)
        alive = (pooled > 0.1).astype(jnp.float32)               # (1, L)
        out_ref[0] = x * alive

    return kernel


def cell_network_forward(grid, rand_hw, w1, b1, w2, b2, num_blocks=None):
    """grid: (B,C,H,W) f32; rand_hw: (H,W) uniform sample (the torch
    distributions.Uniform sample is drawn with jax.random in the wrapper)."""
    B, C, H, W = grid.shape
    hidden = w1.shape[0]
    HW = H * W
    assert C >= 4, "alive mask reads channel 3"

    if num_blocks is None:
        # >= 2 parallel blocks keeps both v7x TensorCores busy; remaining
        # batch elements are fused onto the lane axis inside each block.
        num_blocks = 2 if (B >= 2 and B % 2 == 0) else 1
    assert B % num_blocks == 0
    BB = B // num_blocks
    L = BB * HW

    # (num_blocks, C, BB*HW): batch fused onto lanes, channels on sublanes.
    grid_blk = (grid.astype(jnp.float32)
                .reshape(num_blocks, BB, C, HW)
                .transpose(0, 2, 1, 3)
                .reshape(num_blocks, C, L))

    # Precomputed boundary-validity masks (grid-invariant; tiled per batch
    # element fused into the block).
    idx = jnp.arange(HW, dtype=jnp.int32)
    r, c = idx // W, idx % W

    def tile_mask(m):
        return jnp.tile(m.astype(jnp.float32), BB).reshape(1, L)

    m_up = tile_mask(r >= 1)
    m_dn = tile_mask(r <= H - 2)
    m_lt = tile_mask(c >= 1)
    m_rt = tile_mask(c <= W - 2)

    # The stochastic-update sample is shared across batch and channels.
    rand_flat = jnp.tile(rand_hw.reshape(-1).astype(jnp.float32), BB).reshape(1, L)

    b1c = b1.reshape(hidden, 1).astype(jnp.float32)
    b2c = b2.reshape(C, 1).astype(jnp.float32)

    kernel = _make_cell_kernel(C, H, W, L)

    def full(shape):
        return pl.BlockSpec(shape, lambda b: (0,) * len(shape))

    in_specs = [
        pl.BlockSpec((1, C, L), lambda b: (b, 0, 0)),   # grid (per block)
        full((1, L)),                                   # uniform sample
        full((1, L)), full((1, L)),                     # row masks (up / down)
        full((1, L)), full((1, L)),                     # col masks (left / right)
        full((hidden, 3 * C)),                          # conv1 weight (fused)
        full((hidden, 1)),                              # conv1 bias
        full((C, hidden)),                              # conv2 weight
        full((C, 1)),                                   # conv2 bias
    ]

    out = pl.pallas_call(
        kernel,
        out_shape=jax.ShapeDtypeStruct((num_blocks, C, L), jnp.float32),
        grid=(num_blocks,),
        in_specs=in_specs,
        out_specs=pl.BlockSpec((1, C, L), lambda b: (b, 0, 0)),
        compiler_params=pltpu.CompilerParams(dimension_semantics=("parallel",)),
    )(grid_blk, rand_flat, m_up, m_dn, m_lt, m_rt,
      w1.astype(jnp.float32), b1c, w2.astype(jnp.float32), b2c)

    return (out.reshape(num_blocks, C, BB, HW)
               .transpose(0, 2, 1, 3)
               .reshape(B, C, H, W))


def reference_forward(grid, rand_hw, w1, b1, w2, b2):
    """Pure-JAX reference mirroring the PyTorch module (same RNG sample)."""
    B, C, H, W = grid.shape
    sob_x = jnp.array([[-1., 0., 1.], [-2., 0., 2.], [-1., 0., 1.]], jnp.float32)
    sob_y = sob_x.T

    def flat_conv(g, k):
        x = g.reshape(B * C, 1, H, W)
        y = lax.conv_general_dilated(
            x, k[None, None, :, :], window_strides=(1, 1),
            padding=((1, 1), (1, 1)),
            dimension_numbers=("NCHW", "OIHW", "NCHW"),
            precision=lax.Precision.HIGHEST)
        return y.reshape(B, C, H, W)

    sx = flat_conv(grid, sob_x)
    sy = flat_conv(grid, sob_y)
    perc = jnp.concatenate([sx, sy, grid], axis=1)            # (B, 3C, H, W)
    h = jnp.einsum("oc,bchw->bohw", w1, perc,
                   precision=lax.Precision.HIGHEST) + b1[None, :, None, None]
    h = jnp.maximum(h, 0.0)
    delta = jnp.einsum("oc,bchw->bohw", w2, h,
                       precision=lax.Precision.HIGHEST) + b2[None, :, None, None]
    smask = (rand_hw < 0.5).astype(jnp.float32)
    x = grid + delta * smask[None, None, :, :]
    alpha = x[:, 3]
    pooled = lax.reduce_window(alpha, -jnp.inf, lax.max,
                               window_dimensions=(1, 3, 3),
                               window_strides=(1, 1, 1),
                               padding=((0, 0), (1, 1), (1, 1)))
    alive = (pooled > 0.1).astype(jnp.float32)
    return x * alive[:, None, :, :]


if __name__ == "__main__":
    B, C, H, W, HIDDEN = 2, 4, 16, 16, 128
    key = jax.random.PRNGKey(0)
    kg, kr, k1, k2, k3, k4 = jax.random.split(key, 6)

    grid = jax.random.uniform(kg, (B, C, H, W), jnp.float32)
    rand_hw = jax.random.uniform(kr, (H, W), jnp.float32)  # stochastic-update sample

    # Parameter shapes from the module __init__ (grid_channels=4, hidden=128).
    # NOTE: the reference zero-inits conv2; we use small deterministic random
    # values so the full compute path is actually exercised.
    w1 = 0.1 * jax.random.normal(k1, (HIDDEN, 3 * C), jnp.float32)
    b1 = 0.1 * jax.random.normal(k2, (HIDDEN,), jnp.float32)
    w2 = 0.1 * jax.random.normal(k3, (C, HIDDEN), jnp.float32)
    b2 = 0.1 * jax.random.normal(k4, (C,), jnp.float32)

    out = jax.block_until_ready(cell_network_forward(grid, rand_hw, w1, b1, w2, b2))
    ref = jax.block_until_ready(reference_forward(grid, rand_hw, w1, b1, w2, b2))

    assert out.shape == (B, C, H, W)
    assert jnp.allclose(out, ref, atol=2e-3, rtol=2e-3), \
        f"max abs err {float(jnp.max(jnp.abs(out - ref)))}"
    print("KERNEL_OK")
</pallas_src>

<mosaic_0001>
module attributes {stable_mosaic.version = 11 : i64} {
  func.func @kernel(%arg0: i32, %arg1: memref<1x4x256xf32, #tpu.memory_space<vmem>>, %arg2: memref<1x256xf32, #tpu.memory_space<vmem>>, %arg3: memref<1x256xf32, #tpu.memory_space<vmem>>, %arg4: memref<1x256xf32, #tpu.memory_space<vmem>>, %arg5: memref<1x256xf32, #tpu.memory_space<vmem>>, %arg6: memref<1x256xf32, #tpu.memory_space<vmem>>, %arg7: memref<128x12xf32, #tpu.memory_space<vmem>>, %arg8: memref<128x1xf32, #tpu.memory_space<vmem>>, %arg9: memref<4x128xf32, #tpu.memory_space<vmem>>, %arg10: memref<4x1xf32, #tpu.memory_space<vmem>>, %arg11: memref<1x4x256xf32, #tpu.memory_space<vmem>>) attributes {dimension_semantics = [#tpu.dimension_semantics<parallel>], iteration_bounds = array<i64: 2>, scalar_prefetch = 0 : i64, scratch_operands = 0 : i64, tpu.core_type = #tpu.core_type<tc>, window_params = [{transform_indices = @transform_0, window_bounds = array<i64: 1, 4, 256>}, {pipeline_mode = #tpu.pipeline_mode<synchronous>, transform_indices = @transform_1, window_bounds = array<i64: 1, 256>}, {pipeline_mode = #tpu.pipeline_mode<synchronous>, transform_indices = @transform_2, window_bounds = array<i64: 1, 256>}, {pipeline_mode = #tpu.pipeline_mode<synchronous>, transform_indices = @transform_3, window_bounds = array<i64: 1, 256>}, {pipeline_mode = #tpu.pipeline_mode<synchronous>, transform_indices = @transform_4, window_bounds = array<i64: 1, 256>}, {pipeline_mode = #tpu.pipeline_mode<synchronous>, transform_indices = @transform_5, window_bounds = array<i64: 1, 256>}, {pipeline_mode = #tpu.pipeline_mode<synchronous>, transform_indices = @transform_6, window_bounds = array<i64: 128, 12>}, {pipeline_mode = #tpu.pipeline_mode<synchronous>, transform_indices = @transform_7, window_bounds = array<i64: 128, 1>}, {pipeline_mode = #tpu.pipeline_mode<synchronous>, transform_indices = @transform_8, window_bounds = array<i64: 4, 128>}, {pipeline_mode = #tpu.pipeline_mode<synchronous>, transform_indices = @transform_9, window_bounds = array<i64: 4, 1>}, {transform_indices = @transform_10, window_bounds = array<i64: 1, 4, 256>}]} {
    %c0 = arith.constant 0 : index
    %c0_0 = arith.constant 0 : index
    %c0_1 = arith.constant 0 : index
    %0 = vector.load %arg1[%c0, %c0_0, %c0_1] : memref<1x4x256xf32, #tpu.memory_space<vmem>>, vector<1x4x256xf32>
    %1 = vector.shape_cast %0 : vector<1x4x256xf32> to vector<4x256xf32>
    %c0_2 = arith.constant 0 : index
    %c0_3 = arith.constant 0 : index
    %2 = vector.load %arg3[%c0_2, %c0_3] : memref<1x256xf32, #tpu.memory_space<vmem>>, vector<1x256xf32>
    %c0_4 = arith.constant 0 : index
    %c0_5 = arith.constant 0 : index
    %3 = vector.load %arg4[%c0_4, %c0_5] : memref<1x256xf32, #tpu.memory_space<vmem>>, vector<1x256xf32>
    %c0_6 = arith.constant 0 : index
    %c0_7 = arith.constant 0 : index
    %4 = vector.load %arg5[%c0_6, %c0_7] : memref<1x256xf32, #tpu.memory_space<vmem>>, vector<1x256xf32>
    %c0_8 = arith.constant 0 : index
    %c0_9 = arith.constant 0 : index
    %5 = vector.load %arg6[%c0_8, %c0_9] : memref<1x256xf32, #tpu.memory_space<vmem>>, vector<1x256xf32>
    %c16_i32 = arith.constant 16 : i32
    %6 = tpu.dynamic_rotate %1 by %c16_i32 dim 1 : vector<4x256xf32>, i32 -> vector<4x256xf32>
    %7 = vector.broadcast %2 : vector<1x256xf32> to vector<4x256xf32>
    %8 = arith.mulf %6, %7 : vector<4x256xf32>
    %c240_i32 = arith.constant 240 : i32
    %9 = tpu.dynamic_rotate %1 by %c240_i32 dim 1 : vector<4x256xf32>, i32 -> vector<4x256xf32>
    %10 = vector.broadcast %3 : vector<1x256xf32> to vector<4x256xf32>
    %11 = arith.mulf %9, %10 : vector<4x256xf32>
    %cst = arith.constant 2.000000e+00 : f32
    %12 = vector.broadcast %cst : f32 to vector<4x256xf32>
    %13 = arith.mulf %12, %1 : vector<4x256xf32>
    %14 = arith.addf %8, %13 : vector<4x256xf32>
    %15 = arith.addf %14, %11 : vector<4x256xf32>
    %16 = arith.subf %11, %8 : vector<4x256xf32>
    %c255_i32 = arith.constant 255 : i32
    %17 = tpu.dynamic_rotate %15 by %c255_i32 dim 1 : vector<4x256xf32>, i32 -> vector<4x256xf32>
    %18 = vector.broadcast %5 : vector<1x256xf32> to vector<4x256xf32>
    %19 = arith.mulf %17, %18 : vector<4x256xf32>
    %c1_i32 = arith.constant 1 : i32
    %20 = tpu.dynamic_rotate %15 by %c1_i32 dim 1 : vector<4x256xf32>, i32 -> vector<4x256xf32>
    %21 = vector.broadcast %4 : vector<1x256xf32> to vector<4x256xf32>
    %22 = arith.mulf %20, %21 : vector<4x256xf32>
    %23 = arith.subf %19, %22 : vector<4x256xf32>
    %c1_i32_10 = arith.constant 1 : i32
    %24 = tpu.dynamic_rotate %16 by %c1_i32_10 dim 1 : vector<4x256xf32>, i32 -> vector<4x256xf32>
    %25 = vector.broadcast %4 : vector<1x256xf32> to vector<4x256xf32>
    %26 = arith.mulf %24, %25 : vector<4x256xf32>
    %cst_11 = arith.constant 2.000000e+00 : f32
    %27 = vector.broadcast %cst_11 : f32 to vector<4x256xf32>
    %28 = arith.mulf %27, %16 : vector<4x256xf32>
    %29 = arith.addf %26, %28 : vector<4x256xf32>
    %c255_i32_12 = arith.constant 255 : i32
    %30 = tpu.dynamic_rotate %16 by %c255_i32_12 dim 1 : vector<4x256xf32>, i32 -> vector<4x256xf32>
    %31 = vector.broadcast %5 : vector<1x256xf32> to vector<4x256xf32>
    %32 = arith.mulf %30, %31 : vector<4x256xf32>
    %33 = arith.addf %29, %32 : vector<4x256xf32>
    %34 = tpu.concatenate %23, %33, %1 in 0 : vector<4x256xf32>, vector<4x256xf32>, vector<4x256xf32> -> vector<12x256xf32>
    %c0_13 = arith.constant 0 : index
    %c0_14 = arith.constant 0 : index
    %35 = vector.load %arg7[%c0_13, %c0_14] : memref<128x12xf32, #tpu.memory_space<vmem>>, vector<128x12xf32>
    %cst_15 = arith.constant dense<0.000000e+00> : vector<128x256xf32>
    %36 = tpu.matmul %35, %34, %cst_15 {dimension_numbers = #tpu.dot_dimension_numbers<[1], [0], [0], [1], [0, 0, 1, 1], [], []>} : vector<128x12xf32>, vector<12x256xf32>, vector<128x256xf32> -> vector<128x256xf32>
    %c0_16 = arith.constant 0 : index
    %c0_17 = arith.constant 0 : index
    %37 = vector.load %arg8[%c0_16, %c0_17] : memref<128x1xf32, #tpu.memory_space<vmem>>, vector<128x1xf32>
    %38 = vector.broadcast %37 : vector<128x1xf32> to vector<128x256xf32>
    %39 = arith.addf %36, %38 : vector<128x256xf32>
    %cst_18 = arith.constant 0.000000e+00 : f32
    %40 = vector.broadcast %cst_18 : f32 to vector<128x256xf32>
    %41 = arith.maximumf %39, %40 : vector<128x256xf32>
    %c0_19 = arith.constant 0 : index
    %c0_20 = arith.constant 0 : index
    %42 = vector.load %arg9[%c0_19, %c0_20] : memref<4x128xf32, #tpu.memory_space<vmem>>, vector<4x128xf32>
    %cst_21 = arith.constant dense<0.000000e+00> : vector<4x256xf32>
    %43 = tpu.matmul %42, %41, %cst_21 {dimension_numbers = #tpu.dot_dimension_numbers<[1], [0], [0], [1], [0, 0, 1, 1], [], []>} : vector<4x128xf32>, vector<128x256xf32>, vector<4x256xf32> -> vector<4x256xf32>
    %c0_22 = arith.constant 0 : index
    %c0_23 = arith.constant 0 : index
    %44 = vector.load %arg10[%c0_22, %c0_23] : memref<4x1xf32, #tpu.memory_space<vmem>>, vector<4x1xf32>
    %45 = vector.broadcast %44 : vector<4x1xf32> to vector<4x256xf32>
    %46 = arith.addf %43, %45 : vector<4x256xf32>
    %c0_24 = arith.constant 0 : index
    %c0_25 = arith.constant 0 : index
    %47 = vector.load %arg2[%c0_24, %c0_25] : memref<1x256xf32, #tpu.memory_space<vmem>>, vector<1x256xf32>
    %cst_26 = arith.constant 5.000000e-01 : f32
    %48 = vector.broadcast %cst_26 : f32 to vector<1x256xf32>
    %49 = arith.cmpf olt, %47, %48 : vector<1x256xf32>
    %50 = arith.extui %49 : vector<1x256xi1> to vector<1x256xi32>
    %51 = arith.sitofp %50 : vector<1x256xi32> to vector<1x256xf32>
    %52 = vector.broadcast %51 : vector<1x256xf32> to vector<4x256xf32>
    %53 = arith.mulf %46, %52 : vector<4x256xf32>
    %54 = arith.addf %1, %53 : vector<4x256xf32>
    %55 = vector.extract_strided_slice %54 {offsets = [3, 0], sizes = [1, 256], strides = [1, 1]} : vector<4x256xf32> to vector<1x256xf32>
    %c16_i32_27 = arith.constant 16 : i32
    %56 = tpu.dynamic_rotate %55 by %c16_i32_27 dim 1 : vector<1x256xf32>, i32 -> vector<1x256xf32>
    %57 = arith.mulf %56, %2 : vector<1x256xf32>
    %c240_i32_28 = arith.constant 240 : i32
    %58 = tpu.dynamic_rotate %55 by %c240_i32_28 dim 1 : vector<1x256xf32>, i32 -> vector<1x256xf32>
    %59 = arith.mulf %58, %3 : vector<1x256xf32>
    %60 = arith.maximumf %57, %59 : vector<1x256xf32>
    %61 = arith.maximumf %60, %55 : vector<1x256xf32>
    %c1_i32_29 = arith.constant 1 : i32
    %62 = tpu.dynamic_rotate %61 by %c1_i32_29 dim 1 : vector<1x256xf32>, i32 -> vector<1x256xf32>
    %63 = arith.mulf %62, %4 : vector<1x256xf32>
    %c255_i32_30 = arith.constant 255 : i32
    %64 = tpu.dynamic_rotate %61 by %c255_i32_30 dim 1 : vector<1x256xf32>, i32 -> vector<1x256xf32>
    %65 = arith.mulf %64, %5 : vector<1x256xf32>
    %66 = arith.maximumf %63, %65 : vector<1x256xf32>
    %67 = arith.maximumf %66, %61 : vector<1x256xf32>
    %cst_31 = arith.constant 1.000000e-01 : f32
    %68 = vector.broadcast %cst_31 : f32 to vector<1x256xf32>
    %69 = arith.cmpf ogt, %67, %68 : vector<1x256xf32>
    %70 = arith.extui %69 : vector<1x256xi1> to vector<1x256xi32>
    %71 = arith.sitofp %70 : vector<1x256xi32> to vector<1x256xf32>
    %72 = vector.broadcast %71 : vector<1x256xf32> to vector<4x256xf32>
    %73 = arith.mulf %54, %72 : vector<4x256xf32>
    %c0_32 = arith.constant 0 : index
    %c0_33 = arith.constant 0 : index
    %c0_34 = arith.constant 0 : index
    %74 = vector.load %arg11[%c0_32, %c0_33, %c0_34] : memref<1x4x256xf32, #tpu.memory_space<vmem>>, vector<1x4x256xf32>
    %75 = vector.shape_cast %74 : vector<1x4x256xf32> to vector<4x256xf32>
    %76 = vector.shape_cast %73 : vector<4x256xf32> to vector<1x4x256xf32>
    tpu.vector_store %arg11[%c0_32, %c0_33, %c0_34], %76 {strides = array<i32>} : memref<1x4x256xf32, #tpu.memory_space<vmem>>, vector<1x4x256xf32>,
    return
  }
  func.func @transform_0(%arg0: i32) -> (i32, i32, i32) {
    %c0_i32 = arith.constant 0 : i32
    %c0_i32_0 = arith.constant 0 : i32
    %c0_i32_1 = arith.constant 0 : i32
    return %arg0, %c0_i32, %c0_i32_0 : i32, i32, i32
  }
  func.func @transform_1(%arg0: i32) -> (i32, i32) {
    %c0_i32 = arith.constant 0 : i32
    %c0_i32_0 = arith.constant 0 : i32
    %c0_i32_1 = arith.constant 0 : i32
    return %c0_i32, %c0_i32_0 : i32, i32
  }
  func.func @transform_2(%arg0: i32) -> (i32, i32) {
    %c0_i32 = arith.constant 0 : i32
    %c0_i32_0 = arith.constant 0 : i32
    %c0_i32_1 = arith.constant 0 : i32
    return %c0_i32, %c0_i32_0 : i32, i32
  }
  func.func @transform_3(%arg0: i32) -> (i32, i32) {
    %c0_i32 = arith.constant 0 : i32
    %c0_i32_0 = arith.constant 0 : i32
    %c0_i32_1 = arith.constant 0 : i32
    return %c0_i32, %c0_i32_0 : i32, i32
  }
  func.func @transform_4(%arg0: i32) -> (i32, i32) {
    %c0_i32 = arith.constant 0 : i32
    %c0_i32_0 = arith.constant 0 : i32
    %c0_i32_1 = arith.constant 0 : i32
    return %c0_i32, %c0_i32_0 : i32, i32
  }
  func.func @transform_5(%arg0: i32) -> (i32, i32) {
    %c0_i32 = arith.constant 0 : i32
    %c0_i32_0 = arith.constant 0 : i32
    %c0_i32_1 = arith.constant 0 : i32
    return %c0_i32, %c0_i32_0 : i32, i32
  }
  func.func @transform_6(%arg0: i32) -> (i32, i32) {
    %c0_i32 = arith.constant 0 : i32
    %c0_i32_0 = arith.constant 0 : i32
    %c0_i32_1 = arith.constant 0 : i32
    return %c0_i32, %c0_i32_0 : i32, i32
  }
  func.func @transform_7(%arg0: i32) -> (i32, i32) {
    %c0_i32 = arith.constant 0 : i32
    %c0_i32_0 = arith.constant 0 : i32
    %c0_i32_1 = arith.constant 0 : i32
    return %c0_i32, %c0_i32_0 : i32, i32
  }
  func.func @transform_8(%arg0: i32) -> (i32, i32) {
    %c0_i32 = arith.constant 0 : i32
    %c0_i32_0 = arith.constant 0 : i32
    %c0_i32_1 = arith.constant 0 : i32
    return %c0_i32, %c0_i32_0 : i32, i32
  }
  func.func @transform_9(%arg0: i32) -> (i32, i32) {
    %c0_i32 = arith.constant 0 : i32
    %c0_i32_0 = arith.constant 0 : i32
    %c0_i32_1 = arith.constant 0 : i32
    return %c0_i32, %c0_i32_0 : i32, i32
  }
  func.func @transform_10(%arg0: i32) -> (i32, i32, i32) {
    %c0_i32 = arith.constant 0 : i32
    %c0_i32_0 = arith.constant 0 : i32
    %c0_i32_1 = arith.constant 0 : i32
    return %arg0, %c0_i32, %c0_i32_0 : i32, i32, i32
  }
}

</mosaic_0001>

<llo_original>
// kernel: tpu_custom_call.1
$region0: #{tpu_custom_call.1}
  #allocation0 [shape = 'u32[]', space=smem, size = 0x4, offset = 0x4, fixed_abs, tag = 'smem constant byte address 0x4 - core index']
  #allocation1 [shape = 'u32[144,128]{1,0:T(1,128)}', space=vmem, size = 0x12000, scoped, tag = 'internal scratch']
  %s0 = inlined_call_operand.vmem [shape: f32[2,4,256], index: 0, kind: input, shape index: {}]
  %s1 = inlined_call_operand.vmem [shape: f32[1,256], index: 1, kind: input, shape index: {}]
  %s2 = inlined_call_operand.vmem [shape: f32[1,256], index: 2, kind: input, shape index: {}]
  %s3 = inlined_call_operand.vmem [shape: f32[1,256], index: 3, kind: input, shape index: {}]
  %s4 = inlined_call_operand.vmem [shape: f32[1,256], index: 4, kind: input, shape index: {}]
  %s5 = inlined_call_operand.vmem [shape: f32[1,256], index: 5, kind: input, shape index: {}]
  %s6 = inlined_call_operand.vmem [shape: f32[128,12], index: 6, kind: input, shape index: {}]
  %s7 = inlined_call_operand.vmem [shape: f32[128,1], index: 7, kind: input, shape index: {}]
  %s8 = inlined_call_operand.vmem [shape: f32[4,128], index: 8, kind: input, shape index: {}]
  %s9 = inlined_call_operand.vmem [shape: f32[4,1], index: 9, kind: input, shape index: {}]
  %s10 = inlined_call_operand.hbm [shape: f32[2,4,256], index: 10, kind: output, shape index: {}]
  %s11 = sld [smem:[#allocation0]]
  $region73: #{tpu_custom_call.1} parent=0
    _
  %s13 = ssub.s32 1, %s11
  %s14 = scalar_select 0, %s13, %s11
  $region1: #{tpu_custom_call.1} parent=0
    #allocation2 [shape = 'u8[8192]{0}', space=vmem, size = 0x2000, scoped, tag = 'output window, operand 0']
    #allocation3 [shape = 's32[2]{0}', space=sflag, size = 0x8, scoped, tag = 'scoped memory for tpu_custom_call.1']
    %15 = vsyncpa [#allocation3], 0
    %s16 = scalar_lea.sflag [#allocation3], 1
    %17 = vsyncpa %s16, 0
    loop: start=0, step=1, limit=4
    $region2: #{tpu_custom_call.1} parent=1 // loop_pre_header
      _
    $region3: #{tpu_custom_call.1} parent=1 // loop_header
      %s19 = sphi 0, %s23
      %p20 = scmp.ge.s32.totalorder %s19, 4
      %s29 = sphi 0, %s31
      %s32 = sphi 0, %s29
      %s33 = sphi 0, %s32
      %s49 = sphi 0, %s33
      %s53 = sphi 0, %s53
      %s55 = sphi 0, %s53
      %s56 = sphi 0, %s55
      %s70 = sphi 0, %s56
      %s74 = sphi 0, %s74
      %s76 = sphi 0, %s74
      %s77 = sphi 0, %s76
      %s91 = sphi 0, %s77
      %s95 = sphi 0, %s95
      %s97 = sphi 0, %s95
      %s98 = sphi 0, %s97
      %s112 = sphi 0, %s98
      %s116 = sphi 0, %s116
      %s118 = sphi 0, %s116
      %s119 = sphi 0, %s118
      %s133 = sphi 0, %s119
      %s137 = sphi 0, %s137
      %s139 = sphi 0, %s137
      %s140 = sphi 0, %s139
      %s154 = sphi 0, %s140
      %s158 = sphi 0, %s158
      %s160 = sphi 0, %s158
      %s161 = sphi 0, %s160
      %s175 = sphi 0, %s161
      %s179 = sphi 0, %s179
      %s181 = sphi 0, %s179
      %s182 = sphi 0, %s181
      %s196 = sphi 0, %s182
      %s200 = sphi 0, %s200
      %s202 = sphi 0, %s200
      %s203 = sphi 0, %s202
      %s217 = sphi 0, %s203
      %s221 = sphi 0, %s221
      %s223 = sphi 0, %s221
      %s224 = sphi 0, %s223
      %s238 = sphi 0, %s224
      %s244 = sphi 0, %s246
      %s247 = sphi 0, %s244
      %s248 = sphi 0, %s247
      %s264 = sphi 0, %s248
    $region4: #{tpu_custom_call.1} parent=1 // loop_header_branch
      %22 = sbr.rel (%p20) target = $region8
    $region5: #{tpu_custom_call.1} parent=1 // loop_body
      %s24 = ssub.s32 %s19, 1
      %s25 = ssub.s32 %s19, 2
      %s26 = sadd.s32 %s19, 1
      %s27 = ssub.s32 %s19, %s26
      %p28 = scmp.eq.s32.totalorder %s27, 0
      %s30 = sadd.s32 %s29, 1
      %s31 = scalar_select %p28, %s29, %s30
      %p34 = pneg %p28
      %p35 = scmp.eq.s32.totalorder %s19, 1
      %p36 = por %p34, %p35
      %p37 = scmp.ne.s32.totalorder %s29, %s32
      %p38 = scmp.eq.s32.totalorder %s19, 0
      %p39 = por %p37, %p38
      %p40 = scmp.ne.s32.totalorder %s29, %s32
      %p41 = scmp.eq.s32.totalorder %s24, 1
      %p42 = por %p40, %p41
      %p43 = scmp.ne.s32.totalorder %s32, %s33
      %p44 = scmp.eq.s32.totalorder %s24, 0
      %p45 = por %p43, %p44
      %p46 = scmp.ne.s32.totalorder %s32, %s33
      %p47 = scmp.eq.s32.totalorder %s25, 1
      %p48 = por %p46, %p47
      %p50 = scmp.ne.s32.totalorder %s33, %s49
      %p51 = scmp.eq.s32.totalorder %s25, 0
      %p52 = por %p50, %p51
      %s54 = sadd.s32 %s53, 1
      %p57 = scmp.eq.s32.totalorder %s19, 1
      %p58 = scmp.ne.s32.totalorder %s53, %s55
      %p59 = scmp.eq.s32.totalorder %s19, 0
      %p60 = por %p58, %p59
      %p61 = scmp.ne.s32.totalorder %s53, %s55
      %p62 = scmp.eq.s32.totalorder %s24, 1
      %p63 = por %p61, %p62
      %p64 = scmp.ne.s32.totalorder %s55, %s56
      %p65 = scmp.eq.s32.totalorder %s24, 0
      %p66 = por %p64, %p65
      %p67 = scmp.ne.s32.totalorder %s55, %s56
      %p68 = scmp.eq.s32.totalorder %s25, 1
      %p69 = por %p67, %p68
      %p71 = scmp.ne.s32.totalorder %s56, %s70
      %p72 = scmp.eq.s32.totalorder %s25, 0
      %p73 = por %p71, %p72
      %s75 = sadd.s32 %s74, 1
      %p78 = scmp.eq.s32.totalorder %s19, 1
      %p79 = scmp.ne.s32.totalorder %s74, %s76
      %p80 = scmp.eq.s32.totalorder %s19, 0
      %p81 = por %p79, %p80
      %p82 = scmp.ne.s32.totalorder %s74, %s76
      %p83 = scmp.eq.s32.totalorder %s24, 1
      %p84 = por %p82, %p83
      %p85 = scmp.ne.s32.totalorder %s76, %s77
      %p86 = scmp.eq.s32.totalorder %s24, 0
      %p87 = por %p85, %p86
      %p88 = scmp.ne.s32.totalorder %s76, %s77
      %p89 = scmp.eq.s32.totalorder %s25, 1
      %p90 = por %p88, %p89
      %p92 = scmp.ne.s32.totalorder %s77, %s91
      %p93 = scmp.eq.s32.totalorder %s25, 0
      %p94 = por %p92, %p93
      %s96 = sadd.s32 %s95, 1
      %p99 = scmp.eq.s32.totalorder %s19, 1
      %p100 = scmp.ne.s32.totalorder %s95, %s97
      %p101 = scmp.eq.s32.totalorder %s19, 0
      %p102 = por %p100, %p101
      %p103 = scmp.ne.s32.totalorder %s95, %s97
      %p104 = scmp.eq.s32.totalorder %s24, 1
      %p105 = por %p103, %p104
      %p106 = scmp.ne.s32.totalorder %s97, %s98
      %p107 = scmp.eq.s32.totalorder %s24, 0
      %p108 = por %p106, %p107
      %p109 = scmp.ne.s32.totalorder %s97, %s98
      %p110 = scmp.eq.s32.totalorder %s25, 1
      %p111 = por %p109, %p110
      %p113 = scmp.ne.s32.totalorder %s98, %s112
      %p114 = scmp.eq.s32.totalorder %s25, 0
      %p115 = por %p113, %p114
      %s117 = sadd.s32 %s116, 1
      %p120 = scmp.eq.s32.totalorder %s19, 1
      %p121 = scmp.ne.s32.totalorder %s116, %s118
      %p122 = scmp.eq.s32.totalorder %s19, 0
      %p123 = por %p121, %p122
      %p124 = scmp.ne.s32.totalorder %s116, %s118
      %p125 = scmp.eq.s32.totalorder %s24, 1
      %p126 = por %p124, %p125
      %p127 = scmp.ne.s32.totalorder %s118, %s119
      %p128 = scmp.eq.s32.totalorder %s24, 0
      %p129 = por %p127, %p128
      %p130 = scmp.ne.s32.totalorder %s118, %s119
      %p131 = scmp.eq.s32.totalorder %s25, 1
      %p132 = por %p130, %p131
      %p134 = scmp.ne.s32.totalorder %s119, %s133
      %p135 = scmp.eq.s32.totalorder %s25, 0
      %p136 = por %p134, %p135
      %s138 = sadd.s32 %s137, 1
      %p141 = scmp.eq.s32.totalorder %s19, 1
      %p142 = scmp.ne.s32.totalorder %s137, %s139
      %p143 = scmp.eq.s32.totalorder %s19, 0
      %p144 = por %p142, %p143
      %p145 = scmp.ne.s32.totalorder %s137, %s139
      %p146 = scmp.eq.s32.totalorder %s24, 1
      %p147 = por %p145, %p146
      %p148 = scmp.ne.s32.totalorder %s139, %s140
      %p149 = scmp.eq.s32.totalorder %s24, 0
      %p150 = por %p148, %p149
      %p151 = scmp.ne.s32.totalorder %s139, %s140
      %p152 = scmp.eq.s32.totalorder %s25, 1
      %p153 = por %p151, %p152
      %p155 = scmp.ne.s32.totalorder %s140, %s154
      %p156 = scmp.eq.s32.totalorder %s25, 0
      %p157 = por %p155, %p156
      %s159 = sadd.s32 %s158, 1
      %p162 = scmp.eq.s32.totalorder %s19, 1
      %p163 = scmp.ne.s32.totalorder %s158, %s160
      %p164 = scmp.eq.s32.totalorder %s19, 0
      %p165 = por %p163, %p164
      %p166 = scmp.ne.s32.totalorder %s158, %s160
      %p167 = scmp.eq.s32.totalorder %s24, 1
      %p168 = por %p166, %p167
      %p169 = scmp.ne.s32.totalorder %s160, %s161
      %p170 = scmp.eq.s32.totalorder %s24, 0
      %p171 = por %p169, %p170
      %p172 = scmp.ne.s32.totalorder %s160, %s161
      %p173 = scmp.eq.s32.totalorder %s25, 1
      %p174 = por %p172, %p173
      %p176 = scmp.ne.s32.totalorder %s161, %s175
      %p177 = scmp.eq.s32.totalorder %s25, 0
      %p178 = por %p176, %p177
      %s180 = sadd.s32 %s179, 1
      %p183 = scmp.eq.s32.totalorder %s19, 1
      %p184 = scmp.ne.s32.totalorder %s179, %s181
      %p185 = scmp.eq.s32.totalorder %s19, 0
      %p186 = por %p184, %p185
      %p187 = scmp.ne.s32.totalorder %s179, %s181
      %p188 = scmp.eq.s32.totalorder %s24, 1
      %p189 = por %p187, %p188
      %p190 = scmp.ne.s32.totalorder %s181, %s182
      %p191 = scmp.eq.s32.totalorder %s24, 0
      %p192 = por %p190, %p191
      %p193 = scmp.ne.s32.totalorder %s181, %s182
      %p194 = scmp.eq.s32.totalorder %s25, 1
      %p195 = por %p193, %p194
      %p197 = scmp.ne.s32.totalorder %s182, %s196
      %p198 = scmp.eq.s32.totalorder %s25, 0
      %p199 = por %p197, %p198
      %s201 = sadd.s32 %s200, 1
      %p204 = scmp.eq.s32.totalorder %s19, 1
      %p205 = scmp.ne.s32.totalorder %s200, %s202
      %p206 = scmp.eq.s32.totalorder %s19, 0
      %p207 = por %p205, %p206
      %p208 = scmp.ne.s32.totalorder %s200, %s202
      %p209 = scmp.eq.s32.totalorder %s24, 1
      %p210 = por %p208, %p209
      %p211 = scmp.ne.s32.totalorder %s202, %s203
      %p212 = scmp.eq.s32.totalorder %s24, 0
      %p213 = por %p211, %p212
      %p214 = scmp.ne.s32.totalorder %s202, %s203
      %p215 = scmp.eq.s32.totalorder %s25, 1
      %p216 = por %p214, %p215
      %p218 = scmp.ne.s32.totalorder %s203, %s217
      %p219 = scmp.eq.s32.totalorder %s25, 0
      %p220 = por %p218, %p219
      %s222 = sadd.s32 %s221, 1
      %p225 = scmp.eq.s32.totalorder %s19, 1
      %p226 = scmp.ne.s32.totalorder %s221, %s223
      %p227 = scmp.eq.s32.totalorder %s19, 0
      %p228 = por %p226, %p227
      %p229 = scmp.ne.s32.totalorder %s221, %s223
      %p230 = scmp.eq.s32.totalorder %s24, 1
      %p231 = por %p229, %p230
      %p232 = scmp.ne.s32.totalorder %s223, %s224
      %p233 = scmp.eq.s32.totalorder %s24, 0
      %p234 = por %p232, %p233
      %p235 = scmp.ne.s32.totalorder %s223, %s224
      %p236 = scmp.eq.s32.totalorder %s25, 1
      %p237 = por %p235, %p236
      %p239 = scmp.ne.s32.totalorder %s224, %s238
      %p240 = scmp.eq.s32.totalorder %s25, 0
      %p241 = por %p239, %p240
      %s242 = ssub.s32 %s19, %s26
      %p243 = scmp.eq.s32.totalorder %s242, 0
      %s245 = sadd.s32 %s244, 1
      %s246 = scalar_select %p243, %s244, %s245
      %p249 = pneg %p243
      %p250 = scmp.eq.s32.totalorder %s19, 1
      %p251 = por %p249, %p250
      %p252 = scmp.ne.s32.totalorder %s244, %s247
      %p253 = scmp.eq.s32.totalorder %s19, 0
      %p254 = por %p252, %p253
      %p255 = scmp.ne.s32.totalorder %s244, %s247
      %p256 = scmp.eq.s32.totalorder %s24, 1
      %p257 = por %p255, %p256
      %p258 = scmp.ne.s32.totalorder %s247, %s248
      %p259 = scmp.eq.s32.totalorder %s24, 0
      %p260 = por %p258, %p259
      %p261 = scmp.ne.s32.totalorder %s247, %s248
      %p262 = scmp.eq.s32.totalorder %s25, 1
      %p263 = por %p261, %p262
      %p265 = scmp.ne.s32.totalorder %s248, %s264
      %p266 = scmp.eq.s32.totalorder %s25, 0
      %p267 = por %p265, %p266
      %p268 = scmp.le.s32.totalorder 1, %s19
      %p269 = scmp.lt.s32.totalorder %s19, 3
      %p270 = pnand %p268, %p269
      %p271 = pneg %p270
      // Predicated region
      $region9: #{tpu_custom_call.1} parent=5 // pred_check
        _
      $region10: #{tpu_custom_call.1} parent=5 // pred_check_branch
        %273 = sbr.rel (%p270) target = $region12
      $region11: #{tpu_custom_call.1} parent=5 // pred_region
        %s274 = ssub.s32 %s19, 1
        // Predicated region
        $region13: #{tpu_custom_call.1} parent=11 // pred_check
          %p275 = pneg %p66
        $region14: #{tpu_custom_call.1} parent=11 // pred_check_branch
          %277 = sbr.rel (%p275) target = $region16
        $region15: #{tpu_custom_call.1} parent=11 // pred_region
          _
        $region16: #{tpu_custom_call.1} parent=11 // pred_fallthru
          _
        // Predicated region
        $region17: #{tpu_custom_call.1} parent=11 // pred_check
          %p278 = pneg %p87
        $region18: #{tpu_custom_call.1} parent=11 // pred_check_branch
          %280 = sbr.rel (%p278) target = $region20
        $region19: #{tpu_custom_call.1} parent=11 // pred_region
          _
        $region20: #{tpu_custom_call.1} parent=11 // pred_fallthru
          _
        // Predicated region
        $region21: #{tpu_custom_call.1} parent=11 // pred_check
          %p281 = pneg %p108
        $region22: #{tpu_custom_call.1} parent=11 // pred_check_branch
          %283 = sbr.rel (%p281) target = $region24
        $region23: #{tpu_custom_call.1} parent=11 // pred_region
          _
        $region24: #{tpu_custom_call.1} parent=11 // pred_fallthru
          _
        // Predicated region
        $region25: #{tpu_custom_call.1} parent=11 // pred_check
          %p284 = pneg %p129
        $region26: #{tpu_custom_call.1} parent=11 // pred_check_branch
          %286 = sbr.rel (%p284) target = $region28
        $region27: #{tpu_custom_call.1} parent=11 // pred_region
          _
        $region28: #{tpu_custom_call.1} parent=11 // pred_fallthru
          _
        // Predicated region
        $region29: #{tpu_custom_call.1} parent=11 // pred_check
          %p287 = pneg %p150
        $region30: #{tpu_custom_call.1} parent=11 // pred_check_branch
          %289 = sbr.rel (%p287) target = $region32
        $region31: #{tpu_custom_call.1} parent=11 // pred_region
          _
        $region32: #{tpu_custom_call.1} parent=11 // pred_fallthru
          _
        // Predicated region
        $region33: #{tpu_custom_call.1} parent=11 // pred_check
          %p290 = pneg %p171
        $region34: #{tpu_custom_call.1} parent=11 // pred_check_branch
          %292 = sbr.rel (%p290) target = $region36
        $region35: #{tpu_custom_call.1} parent=11 // pred_region
          _
        $region36: #{tpu_custom_call.1} parent=11 // pred_fallthru
          _
        // Predicated region
        $region37: #{tpu_custom_call.1} parent=11 // pred_check
          %p293 = pneg %p192
        $region38: #{tpu_custom_call.1} parent=11 // pred_check_branch
          %295 = sbr.rel (%p293) target = $region40
        $region39: #{tpu_custom_call.1} parent=11 // pred_region
          _
        $region40: #{tpu_custom_call.1} parent=11 // pred_fallthru
          _
        // Predicated region
        $region41: #{tpu_custom_call.1} parent=11 // pred_check
          %p296 = pneg %p213
        $region42: #{tpu_custom_call.1} parent=11 // pred_check_branch
          %298 = sbr.rel (%p296) target = $region44
        $region43: #{tpu_custom_call.1} parent=11 // pred_region
          _
        $region44: #{tpu_custom_call.1} parent=11 // pred_fallthru
          _
        // Predicated region
        $region45: #{tpu_custom_call.1} parent=11 // pred_check
          %p299 = pneg %p234
        $region46: #{tpu_custom_call.1} parent=11 // pred_check_branch
          %301 = sbr.rel (%p299) target = $region48
        $region47: #{tpu_custom_call.1} parent=11 // pred_region
          _
        $region48: #{tpu_custom_call.1} parent=11 // pred_fallthru
          _
      $region12: #{tpu_custom_call.1} parent=5 // pred_fallthru
        _
      %p302 = scmp.lt.s32.totalorder %s19, 2
      // Predicated region
      $region49: #{tpu_custom_call.1} parent=5 // pred_check
        %p303 = pneg %p302
      $region50: #{tpu_custom_call.1} parent=5 // pred_check_branch
        %305 = sbr.rel (%p303) target = $region52
      $region51: #{tpu_custom_call.1} parent=5 // pred_region
        // Predicated region
        $region53: #{tpu_custom_call.1} parent=51 // pred_check
          %p306 = pneg %p39
        $region54: #{tpu_custom_call.1} parent=51 // pred_check_branch
          %308 = sbr.rel (%p306) target = $region56
        $region55: #{tpu_custom_call.1} parent=51 // pred_region
          %p309 = scmp.lt.s32.totalorder %s19, 1
          %s310 = scalar_select %p309, %s19, 1
          %s311 = smul.addr %s310, 2
          %s312 = smul.addr %s311, 4
          %s313 = scalar_lea.vmem %s0, %s312
        $region56: #{tpu_custom_call.1} parent=51 // pred_fallthru
          _
      $region52: #{tpu_custom_call.1} parent=5 // pred_fallthru
        _
      %p314 = scmp.le.s32.totalorder 1, %s19
      %p315 = scmp.lt.s32.totalorder %s19, 3
      %p316 = pnand %p314, %p315
      %p317 = pneg %p316
      // Predicated region
      $region57: #{tpu_custom_call.1} parent=5 // pred_check
        _
      $region58: #{tpu_custom_call.1} parent=5 // pred_check_branch
        %319 = sbr.rel (%p316) target = $region60
      $region59: #{tpu_custom_call.1} parent=5 // pred_region
        %s320 = ssub.s32 %s19, 1
        %p321 = scmp.lt.s32.totalorder %s24, 1
        %s322 = scalar_select %p321, %s24, 1
        %s323 = smul.addr %s322, 2
        %s324 = smul.addr %s323, 4
        %s325 = scalar_lea.vmem %s0, %s324
        %p326 = pneg %p45
        %p327 = pneg %p42
        %p328 = pneg %p66
        %p329 = pneg %p63
        %p330 = pneg %p87
        %p331 = pneg %p84
        %p332 = pneg %p108
        %p333 = pneg %p105
        %p334 = pneg %p129
        %p335 = pneg %p126
        %p336 = pneg %p150
        %p337 = pneg %p147
        %p338 = pneg %p171
        %p339 = pneg %p168
        %p340 = pneg %p192
        %p341 = pneg %p189
        %p342 = pneg %p213
        %p343 = pneg %p210
        %p344 = pneg %p234
        %p345 = pneg %p231
        %p346 = pneg %p260
        %p347 = pneg %p257
        %s348 = sand.u32 %s247, 1
        %s349 = scalar_lea.sflag [#allocation3], %s348
        %s350 = sand.u32 %s247, 1
        %s351 = smul.addr %s350, 8
        %s352 = scalar_lea.vmem [#allocation2], %s351
        %p353 = scmp.lt.s32.totalorder %s24, 1
        %s354 = scalar_select %p353, %s24, 1
        %s355 = smul.addr %s354, 2
        %s356 = smul.addr %s355, 4
        %s357 = scalar_lea.vmem %s0, %s356
        %v358 = vld [vmem:[%s357] sm:$0xff]
        %v359 = vld [vmem:[%s2] sm:$0x3]
        %v360 = vld [vmem:[%s3] sm:$0x3]
        %v361 = vld [vmem:[%s4] sm:$0x3]
        %v362 = vld [vmem:[%s5] sm:$0x3]
        %v364 = vcombine.high %v358, %v358
        %366 = vrot.lane.b32.xlu0 %v358, 16
        %v367 = vpop.permute.xlu0 %366
        %368 = vrot.lane.b32.xlu0 %v364, 16
        %v369 = vpop.permute.xlu0 %368
        %v370 = vlaneseq
        %v371 = vand.u32 %v370, 127
        %vm372 = vcmp.lt.s32.totalorder %v371, 16
        %v373 = vsel %vm372, %v367, %v369
        %v374 = vsel %vm372, %v369, %v367
        %v376 = vlaneseq
        %v377 = vshrl.u32 %v376, 7
        %v378 = vsub.s32 0, %v377
        %v379 = vrot.slane %v359, %v378
        %v380 = vlaneseq
        %v381 = vshrl.u32 %v380, 7
        %v382 = vsub.s32 1, %v381
        %v383 = vrot.slane %v359, %v382
        %v386 = vmul.f32 %v374, %v379
        %v387 = vmul.f32 %v373, %v383
        %388 = vrot.lane.b32.xlu0 %v358, 112
        %v389 = vpop.permute.xlu0 %388
        %390 = vrot.lane.b32.xlu0 %v364, 112
        %v391 = vpop.permute.xlu0 %390
        %vm392 = vcmp.lt.s32.totalorder %v371, 112
        %v393 = vsel %vm392, %v389, %v391
        %v394 = vsel %vm392, %v391, %v389
        %v396 = vlaneseq
        %v397 = vshrl.u32 %v396, 7
        %v398 = vsub.s32 0, %v397
        %v399 = vrot.slane %v360, %v398
        %v400 = vlaneseq
        %v401 = vshrl.u32 %v400, 7
        %v402 = vsub.s32 1, %v401
        %v403 = vrot.slane %v360, %v402
        %v406 = vmul.f32 %v393, %v399
        %v407 = vmul.f32 %v394, %v403
        %v408 = vmul.f32 %v358, 2.0
        %v410 = vcombine.high %v408, %v408
        %v412 = vadd.f32 %v386, %v408
        %v413 = vadd.f32 %v387, %v410
        %v414 = vadd.f32 %v412, %v406
        %v415 = vadd.f32 %v413, %v407
        %v416 = vsub.f32 %v406, %v386
        %v417 = vsub.f32 %v407, %v387
        %418 = vrot.lane.b32.xlu0 %v414, 127
        %v419 = vpop.permute.xlu0 %418
        %420 = vrot.lane.b32.xlu0 %v415, 127
        %v421 = vpop.permute.xlu0 %420
        %vm422 = vcmp.lt.s32.totalorder %v371, 127
        %v423 = vsel %vm422, %v419, %v421
        %v424 = vsel %vm422, %v421, %v419
        %v426 = vlaneseq
        %v427 = vshrl.u32 %v426, 7
        %v428 = vsub.s32 0, %v427
        %v429 = vrot.slane %v362, %v428
        %v430 = vlaneseq
        %v431 = vshrl.u32 %v430, 7
        %v432 = vsub.s32 1, %v431
        %v433 = vrot.slane %v362, %v432
        %v436 = vmul.f32 %v423, %v429
        %v437 = vmul.f32 %v424, %v433
        %438 = vrot.lane.b32.xlu0 %v414, 1
        %v439 = vpop.permute.xlu0 %438
        %440 = vrot.lane.b32.xlu0 %v415, 1
        %v441 = vpop.permute.xlu0 %440
        %vm442 = vcmp.lt.s32.totalorder %v371, 1
        %v443 = vsel %vm442, %v439, %v441
        %v444 = vsel %vm442, %v441, %v439
        %v446 = vlaneseq
        %v447 = vshrl.u32 %v446, 7
        %v448 = vsub.s32 0, %v447
        %v449 = vrot.slane %v361, %v448
        %v450 = vlaneseq
        %v451 = vshrl.u32 %v450, 7
        %v452 = vsub.s32 1, %v451
        %v453 = vrot.slane %v361, %v452
        %v456 = vmul.f32 %v444, %v449
        %v457 = vmul.f32 %v443, %v453
        %v458 = vsub.f32 %v436, %v456
        %v459 = vsub.f32 %v437, %v457
        %460 = vrot.lane.b32.xlu0 %v416, 1
        %v461 = vpop.permute.xlu0 %460
        %462 = vrot.lane.b32.xlu0 %v417, 1
        %v463 = vpop.permute.xlu0 %462
        %v464 = vsel %vm442, %v461, %v463
        %v465 = vsel %vm442, %v463, %v461
        %v466 = vmul.f32 %v465, %v449
        %v467 = vmul.f32 %v464, %v453
        %v468 = vmul.f32 %v416, 2.0
        %v469 = vmul.f32 %v417, 2.0
        %v470 = vadd.f32 %v466, %v468
        %v471 = vadd.f32 %v467, %v469
        %472 = vrot.lane.b32.xlu0 %v416, 127
        %v473 = vpop.permute.xlu0 %472
        %474 = vrot.lane.b32.xlu0 %v417, 127
        %v475 = vpop.permute.xlu0 %474
        %v476 = vsel %vm422, %v473, %v475
        %v477 = vsel %vm422, %v475, %v473
        %v478 = vmul.f32 %v476, %v429
        %v479 = vmul.f32 %v477, %v433
        %v480 = vadd.f32 %v470, %v478
        %v481 = vadd.f32 %v471, %v479
        %v484 = vrot.slane %v480, 4
        %v485 = vrot.slane %v481, 4
        %vm488 = vcmask 1043456
        %v489 = vsel %vm488, %v458, %v484
        %v490 = vsel %vm488, %v459, %v485
        %v491 = vld [vmem:[%s6] sm:$0xff]
        %v492 = vld [vmem:[%s6 + $0x8] sm:$0xff]
        %v493 = vld [vmem:[%s6 + $0x10] sm:$0xff]
        %v494 = vld [vmem:[%s6 + $0x18] sm:$0xff]
        %v495 = vld [vmem:[%s6 + $0x20] sm:$0xff]
        %v496 = vld [vmem:[%s6 + $0x28] sm:$0xff]
        %v497 = vld [vmem:[%s6 + $0x30] sm:$0xff]
        %v498 = vld [vmem:[%s6 + $0x38] sm:$0xff]
        %v499 = vld [vmem:[%s6 + $0x40] sm:$0xff]
        %v500 = vld [vmem:[%s6 + $0x48] sm:$0xff]
        %v501 = vld [vmem:[%s6 + $0x50] sm:$0xff]
        %v502 = vld [vmem:[%s6 + $0x58] sm:$0xff]
        %v503 = vld [vmem:[%s6 + $0x60] sm:$0xff]
        %v504 = vld [vmem:[%s6 + $0x68] sm:$0xff]
        %v505 = vld [vmem:[%s6 + $0x70] sm:$0xff]
        %v506 = vld [vmem:[%s6 + $0x78] sm:$0xff]
        %v507 = vld [vmem:[%s7] sm:$0xff]
        %v508 = vld [vmem:[%s7 + $0x8] sm:$0xff]
        %v509 = vld [vmem:[%s7 + $0x10] sm:$0xff]
        %v510 = vld [vmem:[%s7 + $0x18] sm:$0xff]
        %v511 = vld [vmem:[%s7 + $0x20] sm:$0xff]
        %v512 = vld [vmem:[%s7 + $0x28] sm:$0xff]
        %v513 = vld [vmem:[%s7 + $0x30] sm:$0xff]
        %v514 = vld [vmem:[%s7 + $0x38] sm:$0xff]
        %v515 = vld [vmem:[%s7 + $0x40] sm:$0xff]
        %v516 = vld [vmem:[%s7 + $0x48] sm:$0xff]
        %v517 = vld [vmem:[%s7 + $0x50] sm:$0xff]
        %v518 = vld [vmem:[%s7 + $0x58] sm:$0xff]
        %v519 = vld [vmem:[%s7 + $0x60] sm:$0xff]
        %v520 = vld [vmem:[%s7 + $0x68] sm:$0xff]
        %v521 = vld [vmem:[%s7 + $0x70] sm:$0xff]
        %v522 = vld [vmem:[%s7 + $0x78] sm:$0xff]
        %524 = vset.pattern.permute.xlu0 0
        %525 = vperm.xlu0 %524, %v507
        %v526 = vpop.permute.xlu0 %525
        %529 = vset.pattern.permute.xlu0 0
        %530 = vperm.xlu0 %529, %v508
        %v531 = vpop.permute.xlu0 %530
        %534 = vset.pattern.permute.xlu0 0
        %535 = vperm.xlu0 %534, %v509
        %v536 = vpop.permute.xlu0 %535
        %539 = vset.pattern.permute.xlu0 0
        %540 = vperm.xlu0 %539, %v510
        %v541 = vpop.permute.xlu0 %540
        %544 = vset.pattern.permute.xlu0 0
        %545 = vperm.xlu0 %544, %v511
        %v546 = vpop.permute.xlu0 %545
        %549 = vset.pattern.permute.xlu0 0
        %550 = vperm.xlu0 %549, %v512
        %v551 = vpop.permute.xlu0 %550
        %554 = vset.pattern.permute.xlu0 0
        %555 = vperm.xlu0 %554, %v513
        %v556 = vpop.permute.xlu0 %555
        %559 = vset.pattern.permute.xlu0 0
        %560 = vperm.xlu0 %559, %v514
        %v561 = vpop.permute.xlu0 %560
        %564 = vset.pattern.permute.xlu0 0
        %565 = vperm.xlu0 %564, %v515
        %v566 = vpop.permute.xlu0 %565
        %569 = vset.pattern.permute.xlu0 0
        %570 = vperm.xlu0 %569, %v516
        %v571 = vpop.permute.xlu0 %570
        %574 = vset.pattern.permute.xlu0 0
        %575 = vperm.xlu0 %574, %v517
        %v576 = vpop.permute.xlu0 %575
        %579 = vset.pattern.permute.xlu0 0
        %580 = vperm.xlu0 %579, %v518
        %v581 = vpop.permute.xlu0 %580
        %584 = vset.pattern.permute.xlu0 0
        %585 = vperm.xlu0 %584, %v519
        %v586 = vpop.permute.xlu0 %585
        %589 = vset.pattern.permute.xlu0 0
        %590 = vperm.xlu0 %589, %v520
        %v591 = vpop.permute.xlu0 %590
        %594 = vset.pattern.permute.xlu0 0
        %595 = vperm.xlu0 %594, %v521
        %v596 = vpop.permute.xlu0 %595
        %599 = vset.pattern.permute.xlu0 0
        %600 = vperm.xlu0 %599, %v522
        %v601 = vpop.permute.xlu0 %600
        %vm603 = vcmask 97280
        %v605 = vsel %vm603, %v491, 0
        %v608 = vsel %vm603, %v492, 0
        %v611 = vsel %vm603, %v493, 0
        %v614 = vsel %vm603, %v494, 0
        %v617 = vsel %vm603, %v495, 0
        %v620 = vsel %vm603, %v496, 0
        %v623 = vsel %vm603, %v497, 0
        %v626 = vsel %vm603, %v498, 0
        %v629 = vsel %vm603, %v499, 0
        %v632 = vsel %vm603, %v500, 0
        %v635 = vsel %vm603, %v501, 0
        %v638 = vsel %vm603, %v502, 0
        %v641 = vsel %vm603, %v503, 0
        %v644 = vsel %vm603, %v504, 0
        %v647 = vsel %vm603, %v505, 0
        %v650 = vsel %vm603, %v506, 0
        %v652 = vsel %vm488, %v358, 0
        %v654 = vsel %vm488, %v364, 0
        %656 = vmatprep.subr.mxu0 %v490
        %657 = vmatpush1.msra.mxu0 %v489
        %658 = vmatprep.subr.mxu0 %v654
        %659 = vmatpush1.msra.mxu0 %v652
        %660 = vmatprep.subr.mxu0 0.0
        %661 = vmatpush1.msra.mxu0 0.0
        %662 = vmatprep.subr.mxu0 0.0
        %663 = vmatpush1.msra.mxu0 0.0
        %664 = vmatprep.subr.mxu0 0.0
        %665 = vmatpush1.msra.mxu0 0.0
        %666 = vmatprep.subr.mxu0 0.0
        %667 = vmatpush1.msra.mxu0 0.0
        %668 = vmatprep.subr.mxu0 0.0
        %669 = vmatpush1.msra.mxu0 0.0
        %670 = vmatprep.subr.mxu0 0.0
        %671 = vmatpush1.msra.mxu0 0.0
        %672 = vmatprep.subr.mxu0 0.0
        %673 = vmatpush1.msra.mxu0 0.0
        %674 = vmatprep.subr.mxu0 0.0
        %675 = vmatpush1.msra.mxu0 0.0
        %676 = vmatprep.subr.mxu0 0.0
        %677 = vmatpush1.msra.mxu0 0.0
        %678 = vmatprep.subr.mxu0 0.0
        %679 = vmatpush1.msra.mxu0 0.0
        %680 = vmatprep.subr.mxu0 0.0
        %681 = vmatpush1.msra.mxu0 0.0
        %682 = vmatprep.subr.mxu0 0.0
        %683 = vmatpush1.msra.mxu0 0.0
        %684 = vmatprep.subr.mxu0 0.0
        %685 = vmatpush1.msra.mxu0 0.0
        %686 = vmatprep.subr.mxu0 0.0
        %687 = vmatpush1.msra.mxu0 0.0
        %688 = vmatprep.subr.mxu0 0.0
        %689 = vmatpush1.msra.mxu0 0.0
        %690 = vmatprep.subr.mxu0 0.0
        %691 = vmatpush1.msra.mxu0 0.0
        %692 = vmatprep.subr.mxu0 0.0
        %693 = vmatpush1.msra.mxu0 0.0
        %694 = vmatprep.subr.mxu0 0.0
        %695 = vmatpush1.msra.mxu0 0.0
        %696 = vmatprep.subr.mxu0 0.0
        %697 = vmatpush1.msra.mxu0 0.0
        %698 = vmatprep.subr.mxu0 0.0
        %699 = vmatpush1.msra.mxu0 0.0
        %700 = vmatprep.subr.mxu0 0.0
        %701 = vmatpush1.msra.mxu0 0.0
        %702 = vmatprep.subr.mxu0 0.0
        %703 = vmatpush1.msra.mxu0 0.0
        %704 = vmatprep.subr.mxu0 0.0
        %705 = vmatpush1.msra.mxu0 0.0
        %706 = vmatprep.subr.mxu0 0.0
        %707 = vmatpush1.msra.mxu0 0.0
        %708 = vmatprep.subr.mxu0 0.0
        %709 = vmatpush1.msra.mxu0 0.0
        %710 = vmatprep.subr.mxu0 0.0
        %711 = vmatpush1.msra.mxu0 0.0
        %712 = vmatprep.subr.mxu0 0.0
        %713 = vmatpush1.msra.mxu0 0.0
        %714 = vmatprep.subr.mxu0 0.0
        %715 = vmatpush1.msra.mxu0 0.0
        %716 = vmatprep.subr.mxu0 0.0
        %717 = vmatpush1.msra.mxu0 0.0
        %718 = vmatprep.subr.mxu0 0.0
        %719 = vmatpush1.msra.mxu0 0.0
        %720 = vmatprep.mubr.f32.mxu0 0.0
        %721 = vmatmul.mubr.f32.gmra.mrb[0].mxu0 %v605
        %v722 = vpop.f32.mrb[0].mxu0
        %v723 = vadd.f32 %v526, %v722
        %v724 = vpop.f32.mrb[0].mxu0
        %v725 = vadd.f32 %v526, %v724
        %726 = vmatprep.mubr.f32.mxu0 0.0
        %727 = vmatmul.mubr.f32.gmra.mrb[0].mxu0 %v608
        %v728 = vpop.f32.mrb[0].mxu0
        %v729 = vadd.f32 %v531, %v728
        %v730 = vpop.f32.mrb[0].mxu0
        %v731 = vadd.f32 %v531, %v730
        %732 = vmatprep.mubr.f32.mxu0 0.0
        %733 = vmatmul.mubr.f32.gmra.mrb[0].mxu0 %v611
        %v734 = vpop.f32.mrb[0].mxu0
        %v735 = vadd.f32 %v536, %v734
        %v736 = vpop.f32.mrb[0].mxu0
        %v737 = vadd.f32 %v536, %v736
        %738 = vmatprep.mubr.f32.mxu0 0.0
        %739 = vmatmul.mubr.f32.gmra.mrb[0].mxu0 %v614
        %v740 = vpop.f32.mrb[0].mxu0
        %v741 = vadd.f32 %v541, %v740
        %v742 = vpop.f32.mrb[0].mxu0
        %v743 = vadd.f32 %v541, %v742
        %744 = vmatprep.mubr.f32.mxu0 0.0
        %745 = vmatmul.mubr.f32.gmra.mrb[0].mxu0 %v617
        %v746 = vpop.f32.mrb[0].mxu0
        %v747 = vadd.f32 %v546, %v746
        %v748 = vpop.f32.mrb[0].mxu0
        %v749 = vadd.f32 %v546, %v748
        %750 = vmatprep.mubr.f32.mxu0 0.0
        %751 = vmatmul.mubr.f32.gmra.mrb[0].mxu0 %v620
        %v752 = vpop.f32.mrb[0].mxu0
        %v753 = vadd.f32 %v551, %v752
        %v754 = vpop.f32.mrb[0].mxu0
        %v755 = vadd.f32 %v551, %v754
        %756 = vmatprep.mubr.f32.mxu0 0.0
        %757 = vmatmul.mubr.f32.gmra.mrb[0].mxu0 %v623
        %v758 = vpop.f32.mrb[0].mxu0
        %v759 = vadd.f32 %v556, %v758
        %v760 = vpop.f32.mrb[0].mxu0
        %v761 = vadd.f32 %v556, %v760
        %762 = vmatprep.mubr.f32.mxu0 0.0
        %763 = vmatmul.mubr.f32.gmra.mrb[0].mxu0 %v626
        %v764 = vpop.f32.mrb[0].mxu0
        %v765 = vadd.f32 %v561, %v764
        %v766 = vpop.f32.mrb[0].mxu0
        %v767 = vadd.f32 %v561, %v766
        %768 = vmatprep.mubr.f32.mxu0 0.0
        %769 = vmatmul.mubr.f32.gmra.mrb[0].mxu0 %v629
        %v770 = vpop.f32.mrb[0].mxu0
        %v771 = vadd.f32 %v566, %v770
        %v772 = vpop.f32.mrb[0].mxu0
        %v773 = vadd.f32 %v566, %v772
        %774 = vmatprep.mubr.f32.mxu0 0.0
        %775 = vmatmul.mubr.f32.gmra.mrb[0].mxu0 %v632
        %v776 = vpop.f32.mrb[0].mxu0
        %v777 = vadd.f32 %v571, %v776
        %v778 = vpop.f32.mrb[0].mxu0
        %v779 = vadd.f32 %v571, %v778
        %780 = vmatprep.mubr.f32.mxu0 0.0
        %781 = vmatmul.mubr.f32.gmra.mrb[0].mxu0 %v635
        %v782 = vpop.f32.mrb[0].mxu0
        %v783 = vadd.f32 %v576, %v782
        %v784 = vpop.f32.mrb[0].mxu0
        %v785 = vadd.f32 %v576, %v784
        %786 = vmatprep.mubr.f32.mxu0 0.0
        %787 = vmatmul.mubr.f32.gmra.mrb[0].mxu0 %v638
        %v788 = vpop.f32.mrb[0].mxu0
        %v789 = vadd.f32 %v581, %v788
        %v790 = vpop.f32.mrb[0].mxu0
        %v791 = vadd.f32 %v581, %v790
        %792 = vmatprep.mubr.f32.mxu0 0.0
        %793 = vmatmul.mubr.f32.gmra.mrb[0].mxu0 %v641
        %v794 = vpop.f32.mrb[0].mxu0
        %v795 = vadd.f32 %v586, %v794
        %v796 = vpop.f32.mrb[0].mxu0
        %v797 = vadd.f32 %v586, %v796
        %798 = vmatprep.mubr.f32.mxu0 0.0
        %799 = vmatmul.mubr.f32.gmra.mrb[0].mxu0 %v644
        %v800 = vpop.f32.mrb[0].mxu0
        %v801 = vadd.f32 %v591, %v800
        %v802 = vpop.f32.mrb[0].mxu0
        %v803 = vadd.f32 %v591, %v802
        %804 = vmatprep.mubr.f32.mxu0 0.0
        %805 = vmatmul.mubr.f32.gmra.mrb[0].mxu0 %v647
        %v806 = vpop.f32.mrb[0].mxu0
        %v807 = vadd.f32 %v596, %v806
        %v808 = vpop.f32.mrb[0].mxu0
        %v809 = vadd.f32 %v596, %v808
        %810 = vmatprep.mubr.f32.mxu0 0.0
        %811 = vmatmul.mubr.f32.gmra.mrb[0].mxu0 %v650
        %v812 = vpop.f32.mrb[0].mxu0
        %v813 = vadd.f32 %v601, %v812
        %v814 = vpop.f32.mrb[0].mxu0
        %v815 = vadd.f32 %v601, %v814
        %816 = vdwg.mxu0
        %v817 = vmax.f32 %v723, 0.0
        %v818 = vmax.f32 %v725, 0.0
        %v819 = vmax.f32 %v729, 0.0
        %v820 = vmax.f32 %v731, 0.0
        %v821 = vmax.f32 %v735, 0.0
        %v822 = vmax.f32 %v737, 0.0
        %v823 = vmax.f32 %v741, 0.0
        %v824 = vmax.f32 %v743, 0.0
        %v825 = vmax.f32 %v747, 0.0
        %v826 = vmax.f32 %v749, 0.0
        %v827 = vmax.f32 %v753, 0.0
        %v828 = vmax.f32 %v755, 0.0
        %v829 = vmax.f32 %v759, 0.0
        %v830 = vmax.f32 %v761, 0.0
        %v831 = vmax.f32 %v765, 0.0
        %v832 = vmax.f32 %v767, 0.0
        %v833 = vmax.f32 %v771, 0.0
        %v834 = vmax.f32 %v773, 0.0
        %v835 = vmax.f32 %v777, 0.0
        %v836 = vmax.f32 %v779, 0.0
        %v837 = vmax.f32 %v783, 0.0
        %v838 = vmax.f32 %v785, 0.0
        %v839 = vmax.f32 %v789, 0.0
        %v840 = vmax.f32 %v791, 0.0
        %v841 = vmax.f32 %v795, 0.0
        %v842 = vmax.f32 %v797, 0.0
        %v843 = vmax.f32 %v801, 0.0
        %v844 = vmax.f32 %v803, 0.0
        %v845 = vmax.f32 %v807, 0.0
        %v846 = vmax.f32 %v809, 0.0
        %v847 = vmax.f32 %v813, 0.0
        %v848 = vmax.f32 %v815, 0.0
        %v849 = vld [vmem:[%s8] sm:$0xf]
        %v850 = vld [vmem:[%s9] sm:$0xf]
        %852 = vset.pattern.permute.xlu0 0
        %853 = vperm.xlu0 %852, %v850
        %v854 = vpop.permute.xlu0 %853
        %856 = vmatprep.subr.mxu0 %v818
        %857 = vmatpush1.msra.mxu0 %v817
        %858 = vmatprep.subr.mxu0 %v820
        %859 = vmatpush1.msra.mxu0 %v819
        %860 = vmatprep.subr.mxu0 %v822
        %861 = vmatpush1.msra.mxu0 %v821
        %862 = vmatprep.subr.mxu0 %v824
        %863 = vmatpush1.msra.mxu0 %v823
        %864 = vmatprep.subr.mxu0 %v826
        %865 = vmatpush1.msra.mxu0 %v825
        %866 = vmatprep.subr.mxu0 %v828
        %867 = vmatpush1.msra.mxu0 %v827
        %868 = vmatprep.subr.mxu0 %v830
        %869 = vmatpush1.msra.mxu0 %v829
        %870 = vmatprep.subr.mxu0 %v832
        %871 = vmatpush1.msra.mxu0 %v831
        %872 = vmatprep.subr.mxu0 %v834
        %873 = vmatpush1.msra.mxu0 %v833
        %874 = vmatprep.subr.mxu0 %v836
        %875 = vmatpush1.msra.mxu0 %v835
        %876 = vmatprep.subr.mxu0 %v838
        %877 = vmatpush1.msra.mxu0 %v837
        %878 = vmatprep.subr.mxu0 %v840
        %879 = vmatpush1.msra.mxu0 %v839
        %880 = vmatprep.subr.mxu0 %v842
        %881 = vmatpush1.msra.mxu0 %v841
        %882 = vmatprep.subr.mxu0 %v844
        %883 = vmatpush1.msra.mxu0 %v843
        %884 = vmatprep.subr.mxu0 %v846
        %885 = vmatpush1.msra.mxu0 %v845
        %886 = vmatprep.subr.mxu0 %v848
        %887 = vmatpush1.msra.mxu0 %v847
        %888 = vmatprep.subr.mxu0 0.0
        %889 = vmatpush1.msra.mxu0 0.0
        %890 = vmatprep.subr.mxu0 0.0
        %891 = vmatpush1.msra.mxu0 0.0
        %892 = vmatprep.subr.mxu0 0.0
        %893 = vmatpush1.msra.mxu0 0.0
        %894 = vmatprep.subr.mxu0 0.0
        %895 = vmatpush1.msra.mxu0 0.0
        %896 = vmatprep.subr.mxu0 0.0
        %897 = vmatpush1.msra.mxu0 0.0
        %898 = vmatprep.subr.mxu0 0.0
        %899 = vmatpush1.msra.mxu0 0.0
        %900 = vmatprep.subr.mxu0 0.0
        %901 = vmatpush1.msra.mxu0 0.0
        %902 = vmatprep.subr.mxu0 0.0
        %903 = vmatpush1.msra.mxu0 0.0
        %904 = vmatprep.subr.mxu0 0.0
        %905 = vmatpush1.msra.mxu0 0.0
        %906 = vmatprep.subr.mxu0 0.0
        %907 = vmatpush1.msra.mxu0 0.0
        %908 = vmatprep.subr.mxu0 0.0
        %909 = vmatpush1.msra.mxu0 0.0
        %910 = vmatprep.subr.mxu0 0.0
        %911 = vmatpush1.msra.mxu0 0.0
        %912 = vmatprep.subr.mxu0 0.0
        %913 = vmatpush1.msra.mxu0 0.0
        %914 = vmatprep.subr.mxu0 0.0
        %915 = vmatpush1.msra.mxu0 0.0
        %916 = vmatprep.subr.mxu0 0.0
        %917 = vmatpush1.msra.mxu0 0.0
        %918 = vmatprep.subr.mxu0 0.0
        %919 = vmatpush1.msra.mxu0 0.0
        %920 = vmatprep.mubr.f32.mxu0 0.0
        %921 = vmatmul.mubr.f32.gmra.mrb[0].mxu0 %v849
        %v922 = vpop.f32.mrb[0].mxu0
        %v923 = vadd.f32 %v854, %v922
        %v924 = vpop.f32.mrb[0].mxu0
        %v925 = vadd.f32 %v854, %v924
        %926 = vdwg.mxu0
        %v927 = vld [vmem:[%s1] sm:$0x3]
        %vm928 = vcmp.lt.f32.partialorder %v927, 0.5
        %v929 = vsel %vm928, 1, 0
        %v930 = vcvt.s32.f32 %v929
        %v932 = vlaneseq
        %v933 = vshrl.u32 %v932, 7
        %v934 = vsub.s32 0, %v933
        %v935 = vrot.slane %v930, %v934
        %v936 = vlaneseq
        %v937 = vshrl.u32 %v936, 7
        %v938 = vsub.s32 1, %v937
        %v939 = vrot.slane %v930, %v938
        %v942 = vmul.f32 %v923, %v935
        %v943 = vmul.f32 %v925, %v939
        %v946 = vcombine.low %v942, %v943
        %v948 = vadd.f32 %v358, %v946
        %v950 = vlaneseq
        %v951 = vshrl.u32 %v950, 7
        %v952 = vsub.s32 3, %v951
        %v953 = vrot.slane %v948, %v952
        %v954 = vlaneseq
        %v955 = vshrl.u32 %v954, 7
        %v956 = vsub.s32 7, %v955
        %v957 = vrot.slane %v948, %v956
        %960 = vrot.lane.b32.xlu0 %v953, 16
        %v961 = vpop.permute.xlu0 %960
        %962 = vrot.lane.b32.xlu0 %v957, 16
        %v963 = vpop.permute.xlu0 %962
        %v964 = vsel %vm372, %v961, %v963
        %v965 = vsel %vm372, %v963, %v961
        %v966 = vmul.f32 %v965, %v379
        %v967 = vmul.f32 %v964, %v383
        %968 = vrot.lane.b32.xlu0 %v953, 112
        %v969 = vpop.permute.xlu0 %968
        %970 = vrot.lane.b32.xlu0 %v957, 112
        %v971 = vpop.permute.xlu0 %970
        %v972 = vsel %vm392, %v969, %v971
        %v973 = vsel %vm392, %v971, %v969
        %v974 = vmul.f32 %v972, %v399
        %v975 = vmul.f32 %v973, %v403
        %v976 = vmax.f32 %v966, %v974
        %v977 = vmax.f32 %v967, %v975
        %v978 = vmax.f32 %v976, %v953
        %v979 = vmax.f32 %v977, %v957
        %980 = vrot.lane.b32.xlu0 %v978, 1
        %v981 = vpop.permute.xlu0 %980
        %982 = vrot.lane.b32.xlu0 %v979, 1
        %v983 = vpop.permute.xlu0 %982
        %v984 = vsel %vm442, %v981, %v983
        %v985 = vsel %vm442, %v983, %v981
        %v986 = vmul.f32 %v985, %v449
        %v987 = vmul.f32 %v984, %v453
        %988 = vrot.lane.b32.xlu0 %v978, 127
        %v989 = vpop.permute.xlu0 %988
        %990 = vrot.lane.b32.xlu0 %v979, 127
        %v991 = vpop.permute.xlu0 %990
        %v992 = vsel %vm422, %v989, %v991
        %v993 = vsel %vm422, %v991, %v989
        %v994 = vmul.f32 %v992, %v429
        %v995 = vmul.f32 %v993, %v433
        %v996 = vmax.f32 %v986, %v994
        %v997 = vmax.f32 %v987, %v995
        %v998 = vmax.f32 %v996, %v978
        %v999 = vmax.f32 %v997, %v979
        %vm1000 = vcmp.gt.f32.partialorder %v998, 0.1
        %vm1001 = vcmp.gt.f32.partialorder %v999, 0.1
        %v1002 = vsel %vm1000, 1, 0
        %v1003 = vsel %vm1001, 1, 0
        %v1004 = vcvt.s32.f32 %v1002
        %v1005 = vcvt.s32.f32 %v1003
        %v1006 = vlaneseq
        %v1007 = vshrl.u32 %v1006, 7
        %v1008 = vsub.s32 0, %v1007
        %v1009 = vrot.slane %v1004, %v1008
        %v1010 = vlaneseq
        %v1011 = vshrl.u32 %v1010, 7
        %v1012 = vsub.s32 0, %v1011
        %v1013 = vrot.slane %v1005, %v1012
        %v1016 = vcombine.low %v1009, %v1013
        %v1018 = vmul.f32 %v948, %v1016
        %1019 = vst [vmem:[%s352] sm:$0xff] %v1018
        %s1020 = sand.u32 %s247, 1
        %s1021 = scalar_lea.sflag [#allocation3], %s1020
        %s1022 = sand.u32 %s247, 1
        %s1023 = smul.addr %s1022, 8
        %s1024 = scalar_lea.vmem [#allocation2], %s1023
        // Predicated region
        $region61: #{tpu_custom_call.1} parent=59 // pred_check
          %p1025 = pneg %p257
        $region62: #{tpu_custom_call.1} parent=59 // pred_check_branch
          %1027 = sbr.rel (%p1025) target = $region64
        $region63: #{tpu_custom_call.1} parent=59 // pred_region
          %s1029 = ssub.s32 128, 128
          %1030 = vsyncadd %s1021, %s1029
          %s1031 = smul.addr %s24, 2
          %s1032 = smul.addr %s1031, 64
          %s1033 = scalar_lea.hbm %s10, %s1032
          %s1035 = sshll.u32 %s1024, 4
          %s1036 = int_to_ptr.vmem [resolvable:$true] %s1035
          %1038 = dma.vmem_to_hbm [thread:$0]  %s1036, 128, %s1033, %s1021
        $region64: #{tpu_custom_call.1} parent=59 // pred_fallthru
          _
      $region60: #{tpu_custom_call.1} parent=5 // pred_fallthru
        _
      %p1039 = scmp.le.s32.totalorder 2, %s19
      // Predicated region
      $region65: #{tpu_custom_call.1} parent=5 // pred_check
        %p1040 = pneg %p1039
      $region66: #{tpu_custom_call.1} parent=5 // pred_check_branch
        %1042 = sbr.rel (%p1040) target = $region68
      $region67: #{tpu_custom_call.1} parent=5 // pred_region
        %s1043 = ssub.s32 %s19, 2
        // Predicated region
        $region69: #{tpu_custom_call.1} parent=67 // pred_check
          %p1044 = pneg %p263
        $region70: #{tpu_custom_call.1} parent=67 // pred_check_branch
          %1046 = sbr.rel (%p1044) target = $region72
        $region71: #{tpu_custom_call.1} parent=67 // pred_region
          %s1047 = sand.u32 %s248, 1
          %s1048 = scalar_lea.sflag [#allocation3], %s1047
          %s1049 = sand.u32 %s248, 1
          %s1050 = smul.addr %s1049, 8
          %s1051 = scalar_lea.vmem [#allocation2], %s1050
          %1052 = dma.done %s1048, 128
        $region72: #{tpu_custom_call.1} parent=67 // pred_fallthru
          _
      $region68: #{tpu_custom_call.1} parent=5 // pred_fallthru
        _
    $region6: #{tpu_custom_call.1} parent=1 // loop_footer
      %s23 = sadd.s32 1, %s19
    $region7: #{tpu_custom_call.1} parent=1 // loop_footer_branch
      %18 = sbr.rel target = $region3
    $region8: #{tpu_custom_call.1} parent=1 // loop_exit
      _
    %1053 = vsyncpa [#allocation3], 1
    %s1054 = scalar_lea.sflag [#allocation3], 1
    %1055 = vsyncpa %s1054, 1

</llo_original>
